<compile_context>
chip_gen: v5e
topology: v5e:2x2
jax: 0.10.0
libtpu: 0.0.40
codegen_flags: <defaults>
</compile_context>

<pallas_src>
import functools

import jax
import jax.numpy as jnp
from jax import lax
from jax.experimental import pallas as pl
from jax.experimental.pallas import tpu as pltpu


def _yolo_kernel(stride, anch_ref, offs_ref, pred_ref, out_ref):
    """One (batch, anchor, GG-tile) block, fully lane-dense.

    anch_ref: SMEM (A, 2)     original pixel anchors (w, h)
    offs_ref: VMEM (2, GGt)   flattened grid offsets pre-scaled by stride
    pred_ref: VMEM (C5, GGt)  raw predictions for one anchor of one image
    out_ref : VMEM (C5, GGt)  decoded predictions, channel-major
    """
    ai = pl.program_id(1)

    p = pred_ref[...].astype(jnp.float32)                    # (C5, GGt)
    chan = lax.broadcasted_iota(jnp.int32, p.shape, 0)        # channel index

    sig = jax.nn.sigmoid(p)

    # x / y: sigmoid(t)*stride + grid_offset*stride ; conf / cls: sigmoid(t)
    off = jnp.where(chan == 0, offs_ref[0:1, :], offs_ref[1:2, :])
    sig_path = jnp.where(chan < 2, sig * stride + off, sig)

    # w / h: exp(t) * pixel_anchor   (== exp(t) * scaled_anchor * stride)
    aw = anch_ref[ai, 0]
    ah = anch_ref[ai, 1]
    wh = jnp.exp(p) * jnp.where(chan == 2, aw, ah)

    is_wh = jnp.logical_and(chan >= 2, chan < 4)
    out_ref[...] = jnp.where(is_wh, wh, sig_path).astype(out_ref.dtype)


def _pick_gg_tile(gg, max_lanes=2048):
    """Largest lane tile <= max_lanes that is a multiple of 128 and divides GG.

    Falls back to the full GG extent (always legal: equals the array dim).
    """
    if gg <= max_lanes:
        return gg
    for t in range(max_lanes - max_lanes % 128, 127, -128):
        if gg % t == 0:
            return t
    return gg


def yolo_forward(x, anchors, num_classes, img_dim=416, gg_tile=None,
                 out_dtype=jnp.float32):
    """Pallas implementation of YOLOLayer.forward(x, targets=None, img_dim)."""
    n, ch, g, g2 = x.shape
    a = len(anchors)
    c5 = num_classes + 5
    assert g == g2 and ch == a * c5
    stride = img_dim / g
    gg = g * g

    if gg_tile is None:
        gg_tile = _pick_gg_tile(gg)
    if gg_tile != gg:
        assert gg % gg_tile == 0 and gg_tile % 128 == 0, (gg, gg_tile)
    num_gg_tiles = gg // gg_tile

    # Tiny side inputs.
    anch = jnp.asarray(anchors, dtype=jnp.float32).reshape(a, 2)     # SMEM
    gx = jnp.tile(jnp.arange(g, dtype=jnp.float32), g)               # k %  g
    gy = jnp.repeat(jnp.arange(g, dtype=jnp.float32), g)             # k // g
    offs = jnp.stack([gx, gy], axis=0) * jnp.float32(stride)         # (2, GG)

    # Lane-dense, channel-major flattened layout (contiguous reshape).
    pred = x.reshape(n, a, c5, gg)

    kernel = functools.partial(_yolo_kernel, float(stride))

    out = pl.pallas_call(
        kernel,
        out_shape=jax.ShapeDtypeStruct((n, a, c5, gg), out_dtype),
        grid=(n, a, num_gg_tiles),
        in_specs=[
            pl.BlockSpec(memory_space=pltpu.MemorySpace.SMEM),        # anchors
            pl.BlockSpec((2, gg_tile), lambda ni, ai, gi: (0, gi)),   # offsets
            pl.BlockSpec((None, None, c5, gg_tile),
                         lambda ni, ai, gi: (ni, ai, 0, gi)),         # preds
        ],
        out_specs=pl.BlockSpec((None, None, c5, gg_tile),
                               lambda ni, ai, gi: (ni, ai, 0, gi)),
        compiler_params=pltpu.CompilerParams(
            dimension_semantics=("parallel", "parallel", "parallel")),
    )(anch, offs, pred)

    # Channel-major (N, A, C5, GG) -> torch layout (N, A*GG, C5): single XLA
    # transpose in the wrapper; kernel stores stay wide and unmasked.
    out = jnp.transpose(out, (0, 1, 3, 2)).reshape(n, a * gg, c5)
    return out, 0


def yolo_reference(x, anchors, num_classes, img_dim=416):
    """Pure-JAX reference mirroring the PyTorch forward (targets=None)."""
    n, ch, g, _ = x.shape
    a = len(anchors)
    c5 = num_classes + 5
    stride = img_dim / g
    pred = x.reshape(n, a, c5, g, g).transpose(0, 1, 3, 4, 2)   # (N,A,G,G,C5)
    sx = jax.nn.sigmoid(pred[..., 0])
    sy = jax.nn.sigmoid(pred[..., 1])
    w = pred[..., 2]
    h = pred[..., 3]
    conf = jax.nn.sigmoid(pred[..., 4])
    cls = jax.nn.sigmoid(pred[..., 5:])
    gx = jnp.arange(g, dtype=jnp.float32).reshape(1, 1, 1, g)
    gy = jnp.arange(g, dtype=jnp.float32).reshape(1, 1, g, 1)
    scaled = jnp.array([[aw / stride, ah / stride] for aw, ah in anchors],
                       dtype=jnp.float32)
    aw = scaled[:, 0].reshape(1, a, 1, 1)
    ah = scaled[:, 1].reshape(1, a, 1, 1)
    boxes = jnp.stack([sx + gx, sy + gy, jnp.exp(w) * aw, jnp.exp(h) * ah], -1)
    out = jnp.concatenate(
        [boxes.reshape(n, -1, 4) * stride,
         conf.reshape(n, -1, 1),
         cls.reshape(n, -1, num_classes)], axis=-1)
    return out


if __name__ == "__main__":
    # 3 anchors, 3 classes -> C5 = 8 channels per anchor.
    anchors = [(10.0, 13.0), (16.0, 30.0), (33.0, 23.0)]
    num_classes = 3
    img_dim = 416
    A, C5 = len(anchors), num_classes + 5

    key = jax.random.PRNGKey(0)

    # (N, G, forced gg_tile): second config exercises the multi-tile GG path.
    for n, g, gg_tile in [(2, 16, None), (2, 32, 256)]:
        key, sub = jax.random.split(key)
        x = 0.5 * jax.random.normal(sub, (n, A * C5, g, g), dtype=jnp.float32)

        out, _zero = yolo_forward(x, anchors, num_classes, img_dim,
                                  gg_tile=gg_tile)
        out = jax.block_until_ready(out)

        ref = yolo_reference(x, anchors, num_classes, img_dim)
        assert out.shape == (n, A * g * g, C5), out.shape
        assert jnp.allclose(out, ref, rtol=1e-5, atol=1e-5), \
            f"mismatch vs reference at G={g}"

    print("KERNEL_OK")
</pallas_src>

<mosaic_0001>
module attributes {stable_mosaic.version = 11 : i64} {
  func.func @_yolo_kernel(%arg0: i32, %arg1: i32, %arg2: i32, %arg3: memref<3x2xf32, #tpu.memory_space<smem>>, %arg4: memref<2x256xf32, #tpu.memory_space<vmem>>, %arg5: memref<1x1x8x256xf32, #tpu.memory_space<vmem>>, %arg6: memref<1x1x8x256xf32, #tpu.memory_space<vmem>>) attributes {dimension_semantics = [#tpu.dimension_semantics<parallel>, #tpu.dimension_semantics<parallel>, #tpu.dimension_semantics<parallel>], iteration_bounds = array<i64: 2, 3, 1>, scalar_prefetch = 0 : i64, scratch_operands = 0 : i64, tpu.core_type = #tpu.core_type<tc>, window_params = [{transform_indices = @transform_0, window_bounds = array<i64: 3, 2>}, {transform_indices = @transform_1, window_bounds = array<i64: 2, 256>}, {transform_indices = @transform_2, window_bounds = array<i64: 1, 1, 8, 256>}, {transform_indices = @transform_3, window_bounds = array<i64: 1, 1, 8, 256>}]} {
    %c0 = arith.constant 0 : index
    %c0_0 = arith.constant 0 : index
    %c0_1 = arith.constant 0 : index
    %c0_2 = arith.constant 0 : index
    %0 = vector.load %arg5[%c0, %c0_0, %c0_1, %c0_2] : memref<1x1x8x256xf32, #tpu.memory_space<vmem>>, vector<1x1x8x256xf32>
    %1 = vector.shape_cast %0 : vector<1x1x8x256xf32> to vector<8x256xf32>
    %2 = tpu.iota {dimensions = array<i32: 0>} : vector<8x256xi32>
    %3 = arith.negf %1 : vector<8x256xf32>
    %4 = math.exp %3 : vector<8x256xf32>
    %cst = arith.constant 1.000000e+00 : f32
    %5 = vector.broadcast %cst : f32 to vector<8x256xf32>
    %6 = arith.addf %5, %4 : vector<8x256xf32>
    %7 = arith.divf %5, %6 : vector<8x256xf32>
    %c0_i32 = arith.constant 0 : i32
    %8 = vector.broadcast %c0_i32 : i32 to vector<8x256xi32>
    %9 = arith.cmpi eq, %2, %8 : vector<8x256xi32>
    %c0_3 = arith.constant 0 : index
    %c0_4 = arith.constant 0 : index
    %10 = vector.load %arg4[%c0_3, %c0_4] : memref<2x256xf32, #tpu.memory_space<vmem>>, vector<1x256xf32>
    %c1 = arith.constant 1 : index
    %c0_5 = arith.constant 0 : index
    %11 = vector.load %arg4[%c1, %c0_5] : memref<2x256xf32, #tpu.memory_space<vmem>>, vector<1x256xf32>
    %12 = vector.shape_cast %10 : vector<1x256xf32> to vector<1x256xf32>
    %13 = vector.broadcast %12 : vector<1x256xf32> to vector<8x256xf32>
    %14 = vector.shape_cast %11 : vector<1x256xf32> to vector<1x256xf32>
    %15 = vector.broadcast %14 : vector<1x256xf32> to vector<8x256xf32>
    %16 = arith.select %9, %13, %15 : vector<8x256xi1>, vector<8x256xf32>
    %c2_i32 = arith.constant 2 : i32
    %17 = vector.broadcast %c2_i32 : i32 to vector<8x256xi32>
    %18 = arith.cmpi slt, %2, %17 : vector<8x256xi32>
    %cst_6 = arith.constant 2.600000e+01 : f32
    %19 = vector.broadcast %cst_6 : f32 to vector<8x256xf32>
    %20 = arith.mulf %7, %19 : vector<8x256xf32>
    %21 = arith.addf %20, %16 : vector<8x256xf32>
    %22 = arith.select %18, %21, %7 : vector<8x256xi1>, vector<8x256xf32>
    %23 = arith.index_cast %arg1 : i32 to index
    %c0_7 = arith.constant 0 : index
    %24 = memref.load %arg3[%23, %c0_7] : memref<3x2xf32, #tpu.memory_space<smem>>
    %25 = arith.index_cast %arg1 : i32 to index
    %c1_8 = arith.constant 1 : index
    %26 = memref.load %arg3[%25, %c1_8] : memref<3x2xf32, #tpu.memory_space<smem>>
    %27 = math.exp %1 : vector<8x256xf32>
    %c2_i32_9 = arith.constant 2 : i32
    %28 = vector.broadcast %c2_i32_9 : i32 to vector<8x256xi32>
    %29 = arith.cmpi eq, %2, %28 : vector<8x256xi32>
    %30 = vector.broadcast %24 : f32 to vector<8x256xf32>
    %31 = vector.broadcast %26 : f32 to vector<8x256xf32>
    %32 = arith.select %29, %30, %31 : vector<8x256xi1>, vector<8x256xf32>
    %33 = arith.mulf %27, %32 : vector<8x256xf32>
    %c2_i32_10 = arith.constant 2 : i32
    %34 = vector.broadcast %c2_i32_10 : i32 to vector<8x256xi32>
    %35 = arith.cmpi sge, %2, %34 : vector<8x256xi32>
    %c4_i32 = arith.constant 4 : i32
    %36 = vector.broadcast %c4_i32 : i32 to vector<8x256xi32>
    %37 = arith.cmpi slt, %2, %36 : vector<8x256xi32>
    %38 = arith.andi %35, %37 : vector<8x256xi1>
    %39 = arith.select %38, %33, %22 : vector<8x256xi1>, vector<8x256xf32>
    %c0_11 = arith.constant 0 : index
    %c0_12 = arith.constant 0 : index
    %c0_13 = arith.constant 0 : index
    %c0_14 = arith.constant 0 : index
    %40 = vector.load %arg6[%c0_11, %c0_12, %c0_13, %c0_14] : memref<1x1x8x256xf32, #tpu.memory_space<vmem>>, vector<1x1x8x256xf32>
    %41 = vector.shape_cast %40 : vector<1x1x8x256xf32> to vector<8x256xf32>
    %42 = vector.shape_cast %39 : vector<8x256xf32> to vector<1x1x8x256xf32>
    tpu.vector_store %arg6[%c0_11, %c0_12, %c0_13, %c0_14], %42 {strides = array<i32>} : memref<1x1x8x256xf32, #tpu.memory_space<vmem>>, vector<1x1x8x256xf32>,
    return
  }
  func.func @transform_0(%arg0: i32, %arg1: i32, %arg2: i32) -> (i32, i32) {
    %c0_i32 = arith.constant 0 : i32
    %c0_i32_0 = arith.constant 0 : i32
    %c0_i32_1 = arith.constant 0 : i32
    return %c0_i32, %c0_i32_0 : i32, i32
  }
  func.func @transform_1(%arg0: i32, %arg1: i32, %arg2: i32) -> (i32, i32) {
    %c0_i32 = arith.constant 0 : i32
    %c0_i32_0 = arith.constant 0 : i32
    return %c0_i32, %arg2 : i32, i32
  }
  func.func @transform_2(%arg0: i32, %arg1: i32, %arg2: i32) -> (i32, i32, i32, i32) {
    %c0_i32 = arith.constant 0 : i32
    %c0_i32_0 = arith.constant 0 : i32
    return %arg0, %arg1, %c0_i32, %arg2 : i32, i32, i32, i32
  }
  func.func @transform_3(%arg0: i32, %arg1: i32, %arg2: i32) -> (i32, i32, i32, i32) {
    %c0_i32 = arith.constant 0 : i32
    %c0_i32_0 = arith.constant 0 : i32
    return %arg0, %arg1, %c0_i32, %arg2 : i32, i32, i32, i32
  }
}

</mosaic_0001>

<llo_original>
// kernel: tpu_custom_call.1
$region0: #{tpu_custom_call.1}
  #allocation0 [shape = 'u32[]', space=smem, size = 0x4, offset = 0x4, fixed_abs, tag = 'smem constant byte address 0x4 - core index']
  #allocation1 [shape = 'u32[72,128]{1,0:T(1,128)}', space=vmem, size = 0x9000, scoped, tag = 'internal scratch']
  %s0 = inlined_call_operand.vmem [shape: f32[3,2], index: 0, kind: input, shape index: {}]
  %s1 = inlined_call_operand.vmem [shape: f32[2,256], index: 1, kind: input, shape index: {}]
  %s2 = inlined_call_operand.hbm [shape: f32[2,3,8,256], index: 2, kind: input, shape index: {}]
  %s3 = inlined_call_operand.hbm [shape: f32[2,3,8,256], index: 3, kind: output, shape index: {}]
  %s4 = sld [smem:[#allocation0]]
  $region53: #{tpu_custom_call.1} parent=0
    _
  %s6 = ssub.s32 1, %s4
  %s7 = scalar_select 0, %s6, %s4
  $region1: #{tpu_custom_call.1} parent=0
    #allocation2 [shape = 'u8[2048]{0}', space=smem, size = 0x800, scoped, tag = 'input window, operand 0, single buffered']
    #allocation3 [shape = 's32[2]{0}', space=sflag, size = 0x8, scoped, tag = 'scoped memory for tpu_custom_call.1']
    #allocation4 [shape = 's32[2]{0}', space=sflag, size = 0x8, scoped, tag = 'scoped memory for tpu_custom_call.1']
    #allocation5 [shape = 's32[2]{0}', space=sflag, size = 0x8, scoped, tag = 'scoped memory for tpu_custom_call.1']
    #allocation6 [shape = 'u8[16384]{0}', space=vmem, size = 0x4000, scoped, tag = 'input window, operand 2']
    #allocation7 [shape = 'u8[16384]{0}', space=vmem, size = 0x4000, scoped, tag = 'output window, operand 0']
    %8 = vsyncpa [#allocation5], 0
    %9 = vsyncpa [#allocation3], 0
    %s10 = scalar_lea.sflag [#allocation3], 1
    %11 = vsyncpa %s10, 0
    %12 = vsyncpa [#allocation4], 0
    %s13 = scalar_lea.sflag [#allocation4], 1
    %14 = vsyncpa %s13, 0
    loop: start=0, step=1, limit=8
    $region2: #{tpu_custom_call.1} parent=1 // loop_pre_header
      _
    $region3: #{tpu_custom_call.1} parent=1 // loop_header
      %s16 = sphi 0, %s20
      %p17 = scmp.ge.s32.totalorder %s16, 8
      %s23 = sphi 0, %s42
      %s24 = sphi 0, %s38
      %s25 = sphi 0, %s34
      %s26 = sphi 0, %s23
      %s27 = sphi 0, %s24
      %s28 = sphi 0, %s25
      %s29 = sphi 0, %s26
      %s30 = sphi 0, %s27
      %s31 = sphi 0, %s28
      %s43 = sphi 0, %s43
      %s45 = sphi 0, %s43
      %s46 = sphi 0, %s45
      %s60 = sphi 0, %s46
      %s66 = sphi 0, %s68
      %s69 = sphi 0, %s66
      %s70 = sphi 0, %s69
      %s86 = sphi 0, %s70
      %s96 = sphi 0, %s98
      %s99 = sphi 0, %s96
      %s100 = sphi 0, %s99
      %s116 = sphi 0, %s100
      %s126 = sphi 0, %s128
      %s129 = sphi 0, %s126
      %s130 = sphi 0, %s129
      %s146 = sphi 0, %s130
    $region4: #{tpu_custom_call.1} parent=1 // loop_header_branch
      %19 = sbr.rel (%p17) target = $region8
    $region5: #{tpu_custom_call.1} parent=1 // loop_body
      %s21 = ssub.s32 %s16, 1
      %s22 = ssub.s32 %s16, 2
      %s32 = sadd.s32 1, %s25
      %p33 = scmp.ge.s32.totalorder %s32, 1
      %s34 = scalar_select %p33, 0, %s32
      %s35 = sadd.s32 1, %s24
      %s36 = scalar_select %p33, %s35, %s24
      %p37 = scmp.ge.s32.totalorder %s36, 3
      %s38 = scalar_select %p37, 0, %s36
      %s39 = sadd.s32 1, %s23
      %s40 = scalar_select %p37, %s39, %s23
      %p41 = scmp.ge.s32.totalorder %s40, 2
      %s42 = scalar_select %p41, 0, %s40
      %s44 = sadd.s32 %s43, 1
      %p47 = scmp.eq.s32.totalorder %s16, 5
      %p48 = scmp.ne.s32.totalorder %s43, %s45
      %p49 = scmp.eq.s32.totalorder %s16, 0
      %p50 = por %p48, %p49
      %p51 = scmp.ne.s32.totalorder %s43, %s45
      %p52 = scmp.eq.s32.totalorder %s21, 5
      %p53 = por %p51, %p52
      %p54 = scmp.ne.s32.totalorder %s45, %s46
      %p55 = scmp.eq.s32.totalorder %s21, 0
      %p56 = por %p54, %p55
      %p57 = scmp.ne.s32.totalorder %s45, %s46
      %p58 = scmp.eq.s32.totalorder %s22, 5
      %p59 = por %p57, %p58
      %p61 = scmp.ne.s32.totalorder %s46, %s60
      %p62 = scmp.eq.s32.totalorder %s22, 0
      %p63 = por %p61, %p62
      %s64 = ssub.s32 %s25, %s34
      %p65 = scmp.eq.s32.totalorder %s64, 0
      %s67 = sadd.s32 %s66, 1
      %s68 = scalar_select %p65, %s66, %s67
      %p71 = pneg %p65
      %p72 = scmp.eq.s32.totalorder %s16, 5
      %p73 = por %p71, %p72
      %p74 = scmp.ne.s32.totalorder %s66, %s69
      %p75 = scmp.eq.s32.totalorder %s16, 0
      %p76 = por %p74, %p75
      %p77 = scmp.ne.s32.totalorder %s66, %s69
      %p78 = scmp.eq.s32.totalorder %s21, 5
      %p79 = por %p77, %p78
      %p80 = scmp.ne.s32.totalorder %s69, %s70
      %p81 = scmp.eq.s32.totalorder %s21, 0
      %p82 = por %p80, %p81
      %p83 = scmp.ne.s32.totalorder %s69, %s70
      %p84 = scmp.eq.s32.totalorder %s22, 5
      %p85 = por %p83, %p84
      %p87 = scmp.ne.s32.totalorder %s70, %s86
      %p88 = scmp.eq.s32.totalorder %s22, 0
      %p89 = por %p87, %p88
      %s90 = ssub.s32 %s23, %s42
      %s91 = ssub.s32 %s24, %s38
      %s92 = sor.u32 %s90, %s91
      %s93 = ssub.s32 %s25, %s34
      %s94 = sor.u32 %s92, %s93
      %p95 = scmp.eq.s32.totalorder %s94, 0
      %s97 = sadd.s32 %s96, 1
      %s98 = scalar_select %p95, %s96, %s97
      %p101 = pneg %p95
      %p102 = scmp.eq.s32.totalorder %s16, 5
      %p103 = por %p101, %p102
      %p104 = scmp.ne.s32.totalorder %s96, %s99
      %p105 = scmp.eq.s32.totalorder %s16, 0
      %p106 = por %p104, %p105
      %p107 = scmp.ne.s32.totalorder %s96, %s99
      %p108 = scmp.eq.s32.totalorder %s21, 5
      %p109 = por %p107, %p108
      %p110 = scmp.ne.s32.totalorder %s99, %s100
      %p111 = scmp.eq.s32.totalorder %s21, 0
      %p112 = por %p110, %p111
      %p113 = scmp.ne.s32.totalorder %s99, %s100
      %p114 = scmp.eq.s32.totalorder %s22, 5
      %p115 = por %p113, %p114
      %p117 = scmp.ne.s32.totalorder %s100, %s116
      %p118 = scmp.eq.s32.totalorder %s22, 0
      %p119 = por %p117, %p118
      %s120 = ssub.s32 %s23, %s42
      %s121 = ssub.s32 %s24, %s38
      %s122 = sor.u32 %s120, %s121
      %s123 = ssub.s32 %s25, %s34
      %s124 = sor.u32 %s122, %s123
      %p125 = scmp.eq.s32.totalorder %s124, 0
      %s127 = sadd.s32 %s126, 1
      %s128 = scalar_select %p125, %s126, %s127
      %p131 = pneg %p125
      %p132 = scmp.eq.s32.totalorder %s16, 5
      %p133 = por %p131, %p132
      %p134 = scmp.ne.s32.totalorder %s126, %s129
      %p135 = scmp.eq.s32.totalorder %s16, 0
      %p136 = por %p134, %p135
      %p137 = scmp.ne.s32.totalorder %s126, %s129
      %p138 = scmp.eq.s32.totalorder %s21, 5
      %p139 = por %p137, %p138
      %p140 = scmp.ne.s32.totalorder %s129, %s130
      %p141 = scmp.eq.s32.totalorder %s21, 0
      %p142 = por %p140, %p141
      %p143 = scmp.ne.s32.totalorder %s129, %s130
      %p144 = scmp.eq.s32.totalorder %s22, 5
      %p145 = por %p143, %p144
      %p147 = scmp.ne.s32.totalorder %s130, %s146
      %p148 = scmp.eq.s32.totalorder %s22, 0
      %p149 = por %p147, %p148
      %p150 = scmp.le.s32.totalorder 1, %s16
      %p151 = scmp.lt.s32.totalorder %s16, 7
      %p152 = pnand %p150, %p151
      %p153 = pneg %p152
      // Predicated region
      $region9: #{tpu_custom_call.1} parent=5 // pred_check
        _
      $region10: #{tpu_custom_call.1} parent=5 // pred_check_branch
        %155 = sbr.rel (%p152) target = $region12
      $region11: #{tpu_custom_call.1} parent=5 // pred_region
        %s156 = ssub.s32 %s16, 1
        // Predicated region
        $region13: #{tpu_custom_call.1} parent=11 // pred_check
          %p157 = pneg %p56
        $region14: #{tpu_custom_call.1} parent=11 // pred_check_branch
          %159 = sbr.rel (%p157) target = $region16
        $region15: #{tpu_custom_call.1} parent=11 // pred_region
          %161 = vsyncadd [#allocation5], 0
          %s163 = sshll.u32 %s0, 4
          %s164 = int_to_ptr.vmem [resolvable:$true] %s163
          %166 = dma.vmem_to_smem %s164, 64, [#allocation2], [#allocation5]
        $region16: #{tpu_custom_call.1} parent=11 // pred_fallthru
          _
        // Predicated region
        $region17: #{tpu_custom_call.1} parent=11 // pred_check
          %p167 = pneg %p82
        $region18: #{tpu_custom_call.1} parent=11 // pred_check_branch
          %169 = sbr.rel (%p167) target = $region20
        $region19: #{tpu_custom_call.1} parent=11 // pred_region
          %s170 = smul.u32 2, %s28
          %p171 = scmp.lt.s32.totalorder %s170, 1
          %s172 = scalar_select %p171, %s170, 1
          %s173 = smul.addr %s172, 2
          %s174 = scalar_lea.vmem %s1, %s173
          %s175 = smul.u32 2, %s28
        $region20: #{tpu_custom_call.1} parent=11 // pred_fallthru
          _
      $region12: #{tpu_custom_call.1} parent=5 // pred_fallthru
        _
      %p176 = scmp.lt.s32.totalorder %s16, 6
      // Predicated region
      $region21: #{tpu_custom_call.1} parent=5 // pred_check
        %p177 = pneg %p176
      $region22: #{tpu_custom_call.1} parent=5 // pred_check_branch
        %179 = sbr.rel (%p177) target = $region24
      $region23: #{tpu_custom_call.1} parent=5 // pred_region
        // Predicated region
        $region25: #{tpu_custom_call.1} parent=23 // pred_check
          %p180 = pneg %p106
        $region26: #{tpu_custom_call.1} parent=23 // pred_check_branch
          %182 = sbr.rel (%p180) target = $region28
        $region27: #{tpu_custom_call.1} parent=23 // pred_region
          %s183 = sand.u32 %s96, 1
          %s184 = scalar_lea.sflag [#allocation3], %s183
          %s185 = sand.u32 %s96, 1
          %s186 = smul.addr %s185, 16
          %s187 = scalar_lea.vmem [#allocation6], %s186
          %s188 = smul.u32 2, %s25
          %190 = vsyncadd %s184, 0
          %s191 = smul.addr %s24, 2
          %s192 = sadd.s32 %s188, %s191
          %s193 = smul.addr %s23, 6
          %s194 = sadd.s32 %s192, %s193
          %s195 = smul.addr %s194, 8
          %s196 = scalar_lea.hbm %s2, %s195
          %s198 = sshll.u32 %s196, 4
          %s199 = int_to_ptr.hbm [resolvable:$true] %s198
          %s200 = sshll.u32 %s187, 4
          %s201 = int_to_ptr.vmem [resolvable:$true] %s200
          %203 = dma.hbm_to_vmem [thread:$0]  %s199, 256, %s201, %s184
        $region28: #{tpu_custom_call.1} parent=23 // pred_fallthru
          _
      $region24: #{tpu_custom_call.1} parent=5 // pred_fallthru
        _
      %p204 = scmp.le.s32.totalorder 1, %s16
      %p205 = scmp.lt.s32.totalorder %s16, 7
      %p206 = pnand %p204, %p205
      %p207 = pneg %p206
      // Predicated region
      $region29: #{tpu_custom_call.1} parent=5 // pred_check
        _
      $region30: #{tpu_custom_call.1} parent=5 // pred_check_branch
        %209 = sbr.rel (%p206) target = $region32
      $region31: #{tpu_custom_call.1} parent=5 // pred_region
        %s210 = ssub.s32 %s16, 1
        // Predicated region
        $region33: #{tpu_custom_call.1} parent=31 // pred_check
          %p211 = pneg %p56
        $region34: #{tpu_custom_call.1} parent=31 // pred_check_branch
          %213 = sbr.rel (%p211) target = $region36
        $region35: #{tpu_custom_call.1} parent=31 // pred_region
          %215 = dma.done [#allocation5], 64
        $region36: #{tpu_custom_call.1} parent=31 // pred_fallthru
          _
        %s216 = sand.u32 %s99, 1
        %s217 = scalar_lea.sflag [#allocation3], %s216
        %s218 = sand.u32 %s99, 1
        %s219 = smul.addr %s218, 16
        %s220 = scalar_lea.vmem [#allocation6], %s219
        // Predicated region
        $region37: #{tpu_custom_call.1} parent=31 // pred_check
          %p221 = pneg %p112
        $region38: #{tpu_custom_call.1} parent=31 // pred_check_branch
          %223 = sbr.rel (%p221) target = $region40
        $region39: #{tpu_custom_call.1} parent=31 // pred_region
          %225 = dma.done %s217, 256
        $region40: #{tpu_custom_call.1} parent=31 // pred_fallthru
          _
        %226 = sfence
        %p227 = pneg %p56
        %p228 = pneg %p53
        %s229 = smul.u32 2, %s28
        %p230 = scmp.lt.s32.totalorder %s229, 1
        %s231 = scalar_select %p230, %s229, 1
        %s232 = smul.addr %s231, 2
        %s233 = scalar_lea.vmem %s1, %s232
        %p234 = pneg %p82
        %p235 = pneg %p79
        %s236 = sand.u32 %s99, 1
        %s237 = scalar_lea.sflag [#allocation3], %s236
        %s238 = sand.u32 %s99, 1
        %s239 = smul.addr %s238, 16
        %s240 = scalar_lea.vmem [#allocation6], %s239
        %p241 = pneg %p112
        %p242 = pneg %p109
        %p243 = pneg %p142
        %p244 = pneg %p139
        %s245 = sand.u32 %s129, 1
        %s246 = scalar_lea.sflag [#allocation4], %s245
        %s247 = sand.u32 %s129, 1
        %s248 = smul.addr %s247, 16
        %s249 = scalar_lea.vmem [#allocation7], %s248
        %s250 = smul.u32 2, %s28
        %p251 = scmp.lt.s32.totalorder %s250, 1
        %s252 = scalar_select %p251, %s250, 1
        %s253 = smul.addr %s252, 2
        %s254 = scalar_lea.vmem %s1, %s253
        %s255 = smul.u32 2, %s28
        %s256 = smul.u32 2, %s28
        %s257 = smul.u32 2, %s28
        %v258 = vld [vmem:[%s220] sm:$0xff]
        %v259 = vld [vmem:[%s220 + $0x8] sm:$0xff]
        %v260 = vlaneseq
        %v261 = vshrl.u32 %v260, 7
        %v262 = vxor.u32 %v258, 2147483648
        %v263 = vxor.u32 %v259, 2147483648
        %v264 = vmul.f32 %v262, 1.442695
        %v265 = vpow.pop %v264
        %v266 = vmul.f32 %v263, 1.442695
        %v267 = vpow.pop %v266
        %v268 = vadd.f32 %v265, 1.0
        %v269 = vadd.f32 %v267, 1.0
        %v270 = vrcp.pop %v268
        %v271 = vmul.f32 %v268, %v270
        %v272 = vsub.f32 1.0, %v271
        %v273 = vmul.f32 %v270, %v272
        %v274 = vadd.f32 %v270, %v273
        %vm275 = vweird.f32 %v268
        %vm276 = vweird.f32 %v270
        %vm277 = vmor %vm275, %vm276
        %v278 = vsel %vm277, %v270, %v274
        %v279 = vand.u32 2147483647, %v268
        %vm280 = vcmp.eq.f32.partialorder %v279, 8.507059e+37
        %v281 = vand.u32 %v268, 2147483648
        %v282 = vor.u32 1.1754944e-38, %v281
        %v283 = vsel %vm280, %v282, %v278
        %v284 = vmul.f32 1.0, %v283
        %v285 = vrcp.pop %v269
        %v286 = vmul.f32 %v269, %v285
        %v287 = vsub.f32 1.0, %v286
        %v288 = vmul.f32 %v285, %v287
        %v289 = vadd.f32 %v285, %v288
        %vm290 = vweird.f32 %v269
        %vm291 = vweird.f32 %v285
        %vm292 = vmor %vm290, %vm291
        %v293 = vsel %vm292, %v285, %v289
        %v294 = vand.u32 2147483647, %v269
        %vm295 = vcmp.eq.f32.partialorder %v294, 8.507059e+37
        %v296 = vand.u32 %v269, 2147483648
        %v297 = vor.u32 1.1754944e-38, %v296
        %v298 = vsel %vm295, %v297, %v293
        %v299 = vmul.f32 1.0, %v298
        %vm300 = vcmp.eq.s32.totalorder %v261, 0
        %v301 = vld [vmem:[%s254] ss:$2 sm:$0x3]
        %s302 = scalar_lea.vmem %s254, 1
        %v303 = vld [vmem:[%s302] ss:$2 sm:$0x3]
        %v305 = vperm.slane %v301, 0
        %v306 = vperm.slane %v301, 1
        %v310 = vperm.slane %v303, 0
        %v311 = vperm.slane %v303, 1
        %v314 = vsel %vm300, %v305, %v310
        %v315 = vsel %vm300, %v306, %v311
        %vm316 = vcmp.lt.s32.totalorder %v261, 2
        %v317 = vmul.f32 %v284, 26.0
        %v318 = vmul.f32 %v299, 26.0
        %v319 = vadd.f32 %v317, %v314
        %v320 = vadd.f32 %v318, %v315
        %v321 = vsel %vm316, %v319, %v284
        %v322 = vsel %vm316, %v320, %v299
        %s323 = smul.u32 %s27, 128
        %s324 = sld [smem:[#allocation2 + %s323]]
        %s325 = sadd.s32 %s323, 1
        %s326 = sld [smem:[#allocation2 + %s325]]
        %v327 = vmul.f32 %v258, 1.442695
        %v328 = vpow.pop %v327
        %v329 = vmul.f32 %v259, 1.442695
        %v330 = vpow.pop %v329
        %vm331 = vcmp.eq.s32.totalorder %v261, 2
        %v332 = vstv %s324
        %v333 = vstv %s326
        %v334 = vsel %vm331, %v332, %v333
        %v335 = vmul.f32 %v328, %v334
        %v336 = vmul.f32 %v330, %v334
        %vm337 = vcmp.ge.s32.totalorder %v261, 2
        %vm338 = vcmp.lt.s32.totalorder %v261, 4
        %vm339 = vmand %vm337, %vm338
        %v340 = vsel %vm339, %v335, %v321
        %v341 = vsel %vm339, %v336, %v322
        %342 = vst [vmem:[%s249] sm:$0xff] %v340
        %343 = vst [vmem:[%s249 + $0x8] sm:$0xff] %v341
        %s344 = sand.u32 %s129, 1
        %s345 = scalar_lea.sflag [#allocation4], %s344
        %s346 = sand.u32 %s129, 1
        %s347 = smul.addr %s346, 16
        %s348 = scalar_lea.vmem [#allocation7], %s347
        // Predicated region
        $region41: #{tpu_custom_call.1} parent=31 // pred_check
          %p349 = pneg %p139
        $region42: #{tpu_custom_call.1} parent=31 // pred_check_branch
          %351 = sbr.rel (%p349) target = $region44
        $region43: #{tpu_custom_call.1} parent=31 // pred_region
          %s352 = smul.u32 2, %s28
          %354 = vsyncadd %s345, 0
          %s355 = smul.addr %s27, 2
          %s356 = sadd.s32 %s352, %s355
          %s357 = smul.addr %s26, 6
          %s358 = sadd.s32 %s356, %s357
          %s359 = smul.addr %s358, 8
          %s360 = scalar_lea.hbm %s3, %s359
          %s362 = sshll.u32 %s348, 4
          %s363 = int_to_ptr.vmem [resolvable:$true] %s362
          %s364 = sshll.u32 %s360, 4
          %s365 = int_to_ptr.hbm [resolvable:$true] %s364
          %367 = dma.vmem_to_hbm [thread:$0]  %s363, 256, %s365, %s345
        $region44: #{tpu_custom_call.1} parent=31 // pred_fallthru
          _
      $region32: #{tpu_custom_call.1} parent=5 // pred_fallthru
        _
      %p368 = scmp.le.s32.totalorder 2, %s16
      // Predicated region
      $region45: #{tpu_custom_call.1} parent=5 // pred_check
        %p369 = pneg %p368
      $region46: #{tpu_custom_call.1} parent=5 // pred_check_branch
        %371 = sbr.rel (%p369) target = $region48
      $region47: #{tpu_custom_call.1} parent=5 // pred_region
        %s372 = ssub.s32 %s16, 2
        // Predicated region
        $region49: #{tpu_custom_call.1} parent=47 // pred_check
          %p373 = pneg %p145
        $region50: #{tpu_custom_call.1} parent=47 // pred_check_branch
          %375 = sbr.rel (%p373) target = $region52
        $region51: #{tpu_custom_call.1} parent=47 // pred_region
          %s376 = sand.u32 %s130, 1
          %s377 = scalar_lea.sflag [#allocation4], %s376
          %s378 = sand.u32 %s130, 1
          %s379 = smul.addr %s378, 16
          %s380 = scalar_lea.vmem [#allocation7], %s379
          %382 = dma.done %s377, 256
        $region52: #{tpu_custom_call.1} parent=47 // pred_fallthru
          _
      $region48: #{tpu_custom_call.1} parent=5 // pred_fallthru
        _
    $region6: #{tpu_custom_call.1} parent=1 // loop_footer
      %s20 = sadd.s32 1, %s16
    $region7: #{tpu_custom_call.1} parent=1 // loop_footer_branch
      %15 = sbr.rel target = $region3
    $region8: #{tpu_custom_call.1} parent=1 // loop_exit
      _
    %383 = vsyncpa [#allocation3], 1
    %s384 = scalar_lea.sflag [#allocation3], 1
    %385 = vsyncpa %s384, 1
    %386 = vsyncpa [#allocation4], 1
    %s387 = scalar_lea.sflag [#allocation4], 1
    %388 = vsyncpa %s387, 1
    %389 = vsyncpa [#allocation5], 1
    %s390 = scalar_lea.sflag [#allocation5], 1
    %391 = vsyncpa %s390, 1

</llo_original>
